<compile_context>
chip_gen: v6e
topology: v6e:2x2x1
jax: 0.10.0
libtpu: 0.0.40
codegen_flags: <defaults>
</compile_context>

<pallas_src>
import functools
import math

import jax
import jax.numpy as jnp
from jax.experimental import pallas as pl
from jax.experimental.pallas import tpu as pltpu

_LANE = 128


def _round_up(a, b):
    return (a + b - 1) // b * b


def _accumulate(x_ref, acc_ref, valid):
    """Accumulate the first `valid` (static int) lanes of the current HW tile.

    Lane-wise f32 VPU adds into the (tr, 128) accumulator; the single
    cross-lane XLU reduce is deferred to the finalize step.  The chunk that
    straddles the array boundary (if any) is masked with a static lane-iota
    compare, so undefined out-of-bounds lanes never reach the accumulator.
    """
    n_full = valid // _LANE
    tail = valid % _LANE
    acc = acc_ref[...]
    for k in range(n_full):
        acc = acc + x_ref[:, k * _LANE:(k + 1) * _LANE].astype(jnp.float32)
    if tail:
        chunk = x_ref[:, n_full * _LANE:(n_full + 1) * _LANE].astype(jnp.float32)
        lane = jax.lax.broadcasted_iota(jnp.int32, chunk.shape, 1)
        acc = acc + jnp.where(lane < tail, chunk, 0.0)
    acc_ref[...] = acc


def _gap_kernel(x_ref, o_ref, acc_ref, *, th, hw, inv_hw):
    h = pl.program_id(1)
    nh = pl.num_programs(1)

    @pl.when(h == 0)
    def _init():
        acc_ref[...] = jnp.zeros_like(acc_ref)

    rem = hw % th  # static: valid lanes in the last HW tile (0 => all full)
    if rem == 0:
        _accumulate(x_ref, acc_ref, th)
    else:
        @pl.when(h < nh - 1)
        def _full_tile():
            _accumulate(x_ref, acc_ref, th)

        @pl.when(h == nh - 1)
        def _ragged_tile():
            _accumulate(x_ref, acc_ref, rem)

    @pl.when(h == nh - 1)
    def _finalize():
        s = jnp.sum(acc_ref[...], axis=-1, keepdims=True)  # one XLU reduce
        o_ref[...] = (s * inv_hw).astype(o_ref.dtype)        # single scale+cast


def global_average_pooling(x, *, tile_bytes=8 << 20, tr_max=128,
                           small_input_fallback=False):
    """x: (N, C, *spatial) -> (N, C); == torch.mean(x.view(N, C, -1), dim=2)."""
    n, c = x.shape[0], x.shape[1]
    hw = math.prod(x.shape[2:])
    rows = n * c
    itemsize = jnp.dtype(x.dtype).itemsize

    x2d = x.reshape(rows, hw)

    # KB-scale inputs: launch overhead dwarfs the reduction -> let XLA do it
    # (or fuse GAP into the producer kernel).  Off by default so this script
    # exercises the Pallas path.
    if small_input_fallback and rows * hw * itemsize <= (64 << 10):
        return jnp.mean(x2d.astype(jnp.float32), axis=1).astype(x.dtype).reshape(n, c)

    # ---- row tile ----------------------------------------------------------
    sublane = max(8, 32 // itemsize)              # 8 f32 / 16 bf16 / 32 int8
    if rows <= tr_max:
        tr = rows                                 # full-dim block
        if rows >= 2 * sublane:                   # give v7x's 2nd TC a tile
            tr = _round_up(pl.cdiv(rows, 2), sublane)
    else:
        tr = tr_max

    # ---- HW tile: dtype-aware byte budget, capped at 128 lane-chunks -------
    th = tile_bytes // (tr * itemsize)
    th = min(th, 128 * _LANE)                     # bound the unrolled loop
    th = max(_LANE, min((th // _LANE) * _LANE, _round_up(hw, _LANE)))

    grid = (pl.cdiv(rows, tr), pl.cdiv(hw, th))   # reduction axis last

    kernel = functools.partial(_gap_kernel, th=th, hw=hw, inv_hw=1.0 / float(hw))

    out2d = pl.pallas_call(
        kernel,
        out_shape=jax.ShapeDtypeStruct((rows, 1), x.dtype),
        grid_spec=pltpu.PrefetchScalarGridSpec(
            num_scalar_prefetch=0,
            grid=grid,
            in_specs=[pl.BlockSpec((tr, th), lambda r, h: (r, h))],
            out_specs=pl.BlockSpec((tr, 1), lambda r, h: (r, 0)),
            scratch_shapes=[pltpu.VMEM((tr, _LANE), jnp.float32)],
        ),
        compiler_params=pltpu.CompilerParams(
            dimension_semantics=("parallel", "arbitrary"),
            # 2 x 8 MiB double-buffered input + scratch fits easily; explicit
            # limit so v5e's 16 MiB scoped default is not the binding cap and
            # v7x's 64 MiB physical VMEM keeps headroom.
            vmem_limit_bytes=40 << 20,
        ),
        cost_estimate=pl.CostEstimate(
            flops=rows * hw,
            bytes_accessed=rows * hw * itemsize + rows * itemsize,
            transcendentals=0,
        ),
    )(x2d)

    return out2d.reshape(n, c)


if __name__ == "__main__":
    key = jax.random.PRNGKey(0)
    x = jax.random.normal(key, (2, 4, 16, 16), dtype=jnp.float32)

    out = global_average_pooling(x)
    out = jax.block_until_ready(out)

    # Reference: same semantics as torch.mean(x.view(N, C, -1), dim=2).
    ref = jnp.mean(x.reshape(2, 4, -1), axis=2)
    assert out.shape == (2, 4)
    assert jnp.allclose(out, ref, atol=1e-5, rtol=1e-5)

    # Ragged spatial size (hw % 128 != 0): exercises the in-kernel lane mask
    # that replaced the out-of-kernel jnp.pad.
    x2 = jax.random.normal(jax.random.PRNGKey(1), (2, 4, 10, 10), dtype=jnp.float32)
    out2 = jax.block_until_ready(global_average_pooling(x2))
    ref2 = jnp.mean(x2.reshape(2, 4, -1), axis=2)
    assert jnp.allclose(out2, ref2, atol=1e-5, rtol=1e-5)

    print("KERNEL_OK")
</pallas_src>

<mosaic_0001>
module attributes {stable_mosaic.version = 11 : i64} {
  func.func @_gap_kernel(%arg0: i32, %arg1: i32, %arg2: memref<8x256xf32, #tpu.memory_space<vmem>>, %arg3: memref<8x1xf32, #tpu.memory_space<vmem>>, %arg4: memref<8x128xf32, #tpu.memory_space<vmem>>) attributes {dimension_semantics = [#tpu.dimension_semantics<parallel>, #tpu.dimension_semantics<arbitrary>], iteration_bounds = array<i64: 1, 1>, scalar_prefetch = 0 : i64, scratch_operands = 1 : i64, tpu.core_type = #tpu.core_type<tc>, window_params = [{transform_indices = @transform_0, window_bounds = array<i64: 8, 256>}, {transform_indices = @transform_1, window_bounds = array<i64: 8, 1>}]} {
    %c0_i32 = arith.constant 0 : i32
    %0 = arith.cmpi eq, %arg1, %c0_i32 : i32
    %1 = arith.extui %0 : i1 to i32
    %c0_i32_0 = arith.constant 0 : i32
    %2 = arith.cmpi ne, %1, %c0_i32_0 : i32
    scf.if %2 {
      %cst = arith.constant 0.000000e+00 : f32
      %12 = vector.broadcast %cst : f32 to vector<8x128xf32>
      %c0_9 = arith.constant 0 : index
      %c0_10 = arith.constant 0 : index
      %13 = vector.load %arg4[%c0_9, %c0_10] : memref<8x128xf32, #tpu.memory_space<vmem>>, vector<8x128xf32>
      tpu.vector_store %arg4[%c0_9, %c0_10], %12 {strides = array<i32>} : memref<8x128xf32, #tpu.memory_space<vmem>>, vector<8x128xf32>,
    } else {
    }
    %c0 = arith.constant 0 : index
    %c0_1 = arith.constant 0 : index
    %3 = vector.load %arg4[%c0, %c0_1] : memref<8x128xf32, #tpu.memory_space<vmem>>, vector<8x128xf32>
    %c0_2 = arith.constant 0 : index
    %c0_3 = arith.constant 0 : index
    %4 = vector.load %arg2[%c0_2, %c0_3] : memref<8x256xf32, #tpu.memory_space<vmem>>, vector<8x128xf32>
    %5 = arith.addf %3, %4 : vector<8x128xf32>
    %c0_4 = arith.constant 0 : index
    %c128 = arith.constant 128 : index
    %6 = vector.load %arg2[%c0_4, %c128] : memref<8x256xf32, #tpu.memory_space<vmem>>, vector<8x128xf32>
    %7 = arith.addf %5, %6 : vector<8x128xf32>
    %c0_5 = arith.constant 0 : index
    %c0_6 = arith.constant 0 : index
    %8 = vector.load %arg4[%c0_5, %c0_6] : memref<8x128xf32, #tpu.memory_space<vmem>>, vector<8x128xf32>
    tpu.vector_store %arg4[%c0_5, %c0_6], %7 {strides = array<i32>} : memref<8x128xf32, #tpu.memory_space<vmem>>, vector<8x128xf32>,
    %c0_i32_7 = arith.constant 0 : i32
    %9 = arith.cmpi eq, %arg1, %c0_i32_7 : i32
    %10 = arith.extui %9 : i1 to i32
    %c0_i32_8 = arith.constant 0 : i32
    %11 = arith.cmpi ne, %10, %c0_i32_8 : i32
    scf.if %11 {
      %c0_9 = arith.constant 0 : index
      %c0_10 = arith.constant 0 : index
      %12 = vector.load %arg4[%c0_9, %c0_10] : memref<8x128xf32, #tpu.memory_space<vmem>>, vector<8x128xf32>
      %cst = arith.constant dense<0.000000e+00> : vector<8xf32>
      %13 = vector.multi_reduction <add>, %12, %cst [1] : vector<8x128xf32> to vector<8xf32>
      %14 = vector.shape_cast %13 : vector<8xf32> to vector<8x1xf32>
      %cst_11 = arith.constant 3.906250e-03 : f32
      %15 = vector.broadcast %cst_11 : f32 to vector<8x1xf32>
      %16 = arith.mulf %14, %15 : vector<8x1xf32>
      %c0_12 = arith.constant 0 : index
      %c0_13 = arith.constant 0 : index
      %17 = vector.load %arg3[%c0_12, %c0_13] : memref<8x1xf32, #tpu.memory_space<vmem>>, vector<8x1xf32>
      tpu.vector_store %arg3[%c0_12, %c0_13], %16 {strides = array<i32>} : memref<8x1xf32, #tpu.memory_space<vmem>>, vector<8x1xf32>,
    } else {
    }
    return
  }
  func.func @transform_0(%arg0: i32, %arg1: i32) -> (i32, i32) {
    %c0_i32 = arith.constant 0 : i32
    return %arg0, %arg1 : i32, i32
  }
  func.func @transform_1(%arg0: i32, %arg1: i32) -> (i32, i32) {
    %c0_i32 = arith.constant 0 : i32
    %c0_i32_0 = arith.constant 0 : i32
    return %arg0, %c0_i32 : i32, i32
  }
}

</mosaic_0001>

<llo_original>
// kernel: tpu_custom_call.1
$region0: #{tpu_custom_call.1}
  #allocation0 [shape = 'u32[]', space=smem, size = 0x4, offset = 0x4, fixed_abs, tag = 'smem constant byte address 0x4 - core index']
  #allocation1 [shape = 'u32[144,128]{1,0:T(1,128)}', space=vmem, size = 0x12000, scoped, tag = 'internal scratch']
  #allocation2 [shape = 'f32[8,128]{1,0:T(8,128)}', space=vmem, size = 0x1000, scoped, tag = 'scratch operand']
  %s0 = inlined_call_operand.hbm [shape: f32[8,256], index: 0, kind: input, shape index: {}]
  %s1 = inlined_call_operand.vmem [shape: f32[8,1], index: 1, kind: output, shape index: {}]
  %s2 = sld [smem:[#allocation0]]
  $region26: #{tpu_custom_call.1} parent=0
    _
  %s4 = ssub.s32 1, %s2
  %s5 = scalar_select 0, %s4, %s2
  $region1: #{tpu_custom_call.1} parent=0
    #allocation3 [shape = 'u8[8192]{0}', space=vmem, size = 0x2000, scoped, tag = 'input window, operand 0, single buffered']
    #allocation4 [shape = 's32[1]{0}', space=sflag, size = 0x4, scoped, tag = 'scoped memory for tpu_custom_call.1']
    %6 = vsyncpa [#allocation4], 0
    // Predicated region
    $region2: #{tpu_custom_call.1} parent=1 // pred_check
      _
    $region3: #{tpu_custom_call.1} parent=1 // pred_check_branch
      %8 = sbr.rel (0) target = $region5
    $region4: #{tpu_custom_call.1} parent=1 // pred_region
      %s10 = ssub.s32 256, 256
      %11 = vsyncadd [#allocation4], %s10
      %s13 = sshll.u32 [#allocation3], 4
      %s14 = int_to_ptr.vmem [resolvable:$true] %s13
      %16 = dma.hbm_to_vmem [thread:$0]  %s0, 256, %s14, [#allocation4]
    $region5: #{tpu_custom_call.1} parent=1 // pred_fallthru
      _
    // Predicated region
    $region6: #{tpu_custom_call.1} parent=1 // pred_check
      _
    $region7: #{tpu_custom_call.1} parent=1 // pred_check_branch
      %18 = sbr.rel (0) target = $region9
    $region8: #{tpu_custom_call.1} parent=1 // pred_region
      %19 = dma.done [#allocation4], 256
    $region9: #{tpu_custom_call.1} parent=1 // pred_fallthru
      _
    %p20 = scmp.eq.s32.totalorder 0, 0
    // Predicated region
    $region10: #{tpu_custom_call.1} parent=1 // pred_check
      %p21 = pneg %p20
    $region11: #{tpu_custom_call.1} parent=1 // pred_check_branch
      %23 = sbr.rel (%p21) target = $region13
    $region12: #{tpu_custom_call.1} parent=1 // pred_region
      %24 = vst [vmem:[#allocation2] sm:$0xff] 0.0
    $region13: #{tpu_custom_call.1} parent=1 // pred_fallthru
      _
    %v25 = vld [vmem:[#allocation2] sm:$0xff]
    %v26 = vld [vmem:[#allocation3] sm:$0xff]
    %v27 = vadd.f32 %v25, %v26
    %v28 = vld [vmem:[#allocation3 + $0x8] sm:$0xff]
    %v29 = vadd.f32 %v27, %v28
    %30 = vst [vmem:[#allocation2] sm:$0xff] %v29
    // Predicated region
    $region14: #{tpu_custom_call.1} parent=1 // pred_check
      %p31 = pneg %p20
    $region15: #{tpu_custom_call.1} parent=1 // pred_check_branch
      %33 = sbr.rel (%p31) target = $region17
    $region16: #{tpu_custom_call.1} parent=1 // pred_region
      %v34 = vld [vmem:[#allocation2] sm:$0xff]
      %35 = vadd.xlane.f32.xlu0 %v34
      %v36 = vpop.xlane.xlu0 %35
      %v37 = vmul.f32 %v36, 0.00390625
      %vm38 = vcmask 7168
      %39 = vst.msk [vmem:[%s1] sm:$0xff] %vm38, %v37
    $region17: #{tpu_custom_call.1} parent=1 // pred_fallthru
      _
    // Predicated region
    $region18: #{tpu_custom_call.1} parent=1 // pred_check
      _
    $region19: #{tpu_custom_call.1} parent=1 // pred_check_branch
      %41 = sbr.rel (0) target = $region21
    $region20: #{tpu_custom_call.1} parent=1 // pred_region
      _
    $region21: #{tpu_custom_call.1} parent=1 // pred_fallthru
      _
    // Predicated region
    $region22: #{tpu_custom_call.1} parent=1 // pred_check
      _
    $region23: #{tpu_custom_call.1} parent=1 // pred_check_branch
      %43 = sbr.rel (0) target = $region25
    $region24: #{tpu_custom_call.1} parent=1 // pred_region
      _
    $region25: #{tpu_custom_call.1} parent=1 // pred_fallthru
      _
    %44 = vsyncpa [#allocation4], 1

</llo_original>
